<compile_context>
chip_gen: v6e
topology: v6e:2x2x1
jax: 0.10.0
libtpu: 0.0.40
codegen_flags: <defaults>
</compile_context>

<pallas_src>
import functools
import math

import jax
import jax.numpy as jnp
from jax.experimental import pallas as pl
from jax.experimental.pallas import tpu as pltpu

_LANE = 128
_SUB = 8

# Double-buffered input-block budget and explicit scoped-VMEM limit.
# 22 MiB of blocks + ~1.5 MiB chunk temporaries + scratch stays well under the
# 32 MiB limit (valid on v5e/v6e/v7x; v7x physical VMEM is 64 MiB per TC).
_BLOCK_BUDGET = 22 * 1024 * 1024
_VMEM_LIMIT = 32 * 1024 * 1024
_CHUNK_TARGET_BYTES = 256 * 1024   # per-chunk f32 temporary target


def _round_up(x, m):
    return ((x + m - 1) // m) * m


def _round_down(x, m):
    return (x // m) * m


# ---------------------------------------------------------------------------
# Path A: integer class labels (pred.ndim == label.ndim + 1); one-hot fused.
# ---------------------------------------------------------------------------
def _tversky_onehot_kernel(p_ref, l_ref, out_ref, tp_acc, sp_acc, cnt_acc, *,
                           num_classes, s_total, ts, chunk, nsplit, num_h,
                           needs_mask):
    gi = pl.program_id(0)
    hi = pl.program_id(1)

    @pl.when(hi == 0)
    def _init():
        tp_acc[...] = jnp.zeros_like(tp_acc)
        sp_acc[...] = jnp.zeros_like(sp_acc)
        cnt_acc[...] = jnp.zeros_like(cnt_acc)

    c = num_classes
    if needs_mask:
        # Global tile index (unclamped) -> lane-position base for the S mask.
        if nsplit == 1:
            tile = hi
        else:
            tile = (gi % nsplit) * num_h + hi
        base = tile * ts

    # Static lane-chunk loop: keeps per-op VMEM temporaries small while the
    # DMA'd block stays large.  (Iteration count is bounded ~<=44.)
    off = 0
    while off < ts:
        w = min(chunk, ts - off)
        p = p_ref[0, :, off:off + w].astype(jnp.float32)      # (C, w)
        lab = l_ref[0, :, off:off + w].astype(jnp.int32)      # (1, w)
        cls = jax.lax.broadcasted_iota(jnp.int32, (c, w), 0)
        onehot = lab == cls                                   # (C, w)
        in_range = (lab >= 0) & (lab < c)                     # (1, w)
        if needs_mask:
            pos = base + off + jax.lax.broadcasted_iota(jnp.int32, (1, w), 1)
            ok = pos < s_total                                # (1, w)
            onehot = onehot & ok
            # select (replace), never multiply: OOB lanes may hold garbage.
            sp_c = jnp.where(ok, p, 0.0)
            cnt_c = in_range & ok
        else:
            sp_c = p
            cnt_c = in_range
        tp_c = jnp.where(onehot, p, 0.0)

        tp_acc[...] += jnp.sum(tp_c, axis=-1, keepdims=True)            # (C,1)
        sp_acc[...] += jnp.sum(sp_c, axis=-1, keepdims=True)            # (C,1)
        cnt_acc[...] += jnp.sum(cnt_c.astype(jnp.float32), axis=-1,
                                keepdims=True)                           # (1,1)
        off += w

    @pl.when(hi == pl.num_programs(1) - 1)
    def _finalize():
        s_tp = jnp.sum(tp_acc[...])
        s_p = jnp.sum(sp_acc[...])
        s_l = jnp.sum(cnt_acc[...])
        rid = jax.lax.broadcasted_iota(jnp.int32, (_SUB, _LANE), 0)
        out_ref[0] = jnp.where(rid == 0, s_tp,
                     jnp.where(rid == 1, s_p,
                     jnp.where(rid == 2, s_l, 0.0)))


def _tversky_sums_onehot(pred, label, block_budget):
    b, c = pred.shape[0], pred.shape[1]
    s = int(math.prod(pred.shape[2:])) if pred.ndim > 2 else 1
    s = max(s, 1)

    pred3 = pred.reshape(b, c, s)              # trailing-dim collapse: free
    lab3 = label.reshape(b, 1, s)
    if not jnp.issubdtype(lab3.dtype, jnp.integer):
        lab3 = lab3.astype(jnp.int32)          # rare: non-integer class ids

    cp = _round_up(c, _SUB)
    # Per-lane cost of the double-buffered input blocks (pred padded to cp
    # sublanes, int label padded to 8 sublanes of 4 bytes).
    per_lane = 2 * cp * pred.dtype.itemsize + 2 * _SUB * 4
    ts = max(_LANE, _round_down(block_budget // per_lane, _LANE))
    if s <= ts:
        ts = s
        total_tiles = 1
    else:
        total_tiles = pl.cdiv(s, ts)

    # Guarantee >=2 blocks on the parallel axis for v7x's 2 TensorCores.
    nsplit = 2 if (b == 1 and total_tiles >= 2) else 1
    num_h = pl.cdiv(total_tiles, nsplit)
    needs_mask = (nsplit * num_h * ts) != s

    chunk = max(_LANE, _round_down(_CHUNK_TARGET_BYTES // (cp * 4), _LANE))

    if nsplit == 1:
        p_map = lambda gi, hi: (gi, 0, hi)
        l_map = lambda gi, hi: (gi, 0, hi)
    else:
        def _tile(gi, hi):
            # Clamp duplicated trailing tiles; their contribution is zeroed
            # by the in-kernel (pos < s) lane mask, so no double counting.
            return jnp.minimum((gi % nsplit) * num_h + hi, total_tiles - 1)
        p_map = lambda gi, hi: (gi // nsplit, 0, _tile(gi, hi))
        l_map = lambda gi, hi: (gi // nsplit, 0, _tile(gi, hi))

    kernel = functools.partial(
        _tversky_onehot_kernel, num_classes=c, s_total=s, ts=ts, chunk=chunk,
        nsplit=nsplit, num_h=num_h, needs_mask=needs_mask)

    out = pl.pallas_call(
        kernel,
        out_shape=jax.ShapeDtypeStruct((b * nsplit, _SUB, _LANE), jnp.float32),
        grid_spec=pltpu.PrefetchScalarGridSpec(
            num_scalar_prefetch=0,
            grid=(b * nsplit, num_h),
            in_specs=[
                pl.BlockSpec((1, c, ts), p_map),
                pl.BlockSpec((1, 1, ts), l_map),
            ],
            out_specs=pl.BlockSpec((1, _SUB, _LANE), lambda gi, hi: (gi, 0, 0)),
            scratch_shapes=[
                pltpu.VMEM((c, 1), jnp.float32),
                pltpu.VMEM((c, 1), jnp.float32),
                pltpu.VMEM((1, 1), jnp.float32),
            ],
        ),
        compiler_params=pltpu.CompilerParams(
            dimension_semantics=("parallel", "arbitrary"),
            vmem_limit_bytes=_VMEM_LIMIT),
    )(pred3, lab3)
    return jnp.sum(out[:, 0, 0]), jnp.sum(out[:, 1, 0]), jnp.sum(out[:, 2, 0])


# ---------------------------------------------------------------------------
# Path B: label already has pred's shape (soft / pre-expanded labels).
# ---------------------------------------------------------------------------
def _tversky_dense_kernel(p_ref, l_ref, out_ref, acc_ref, *, s_total, ts,
                          chunk, nsplit, num_h, needs_mask):
    gi = pl.program_id(0)
    hi = pl.program_id(1)

    @pl.when(hi == 0)
    def _init():
        acc_ref[...] = jnp.zeros_like(acc_ref)

    if needs_mask:
        if nsplit == 1:
            tile = hi
        else:
            tile = (gi % nsplit) * num_h + hi
        base = tile * ts

    off = 0
    while off < ts:     # static lane-chunk loop
        w = min(chunk, ts - off)
        p = p_ref[:, off:off + w].astype(jnp.float32)     # (R, w)
        lbl = l_ref[:, off:off + w].astype(jnp.float32)   # (R, w)
        if needs_mask:
            pos = base + off + jax.lax.broadcasted_iota(jnp.int32, (1, w), 1)
            ok = pos < s_total                            # (1, w)
            prod_c = jnp.where(ok, p * lbl, 0.0)
            p_c = jnp.where(ok, p, 0.0)
            l_c = jnp.where(ok, lbl, 0.0)
        else:
            prod_c = p * lbl
            p_c = p
            l_c = lbl
        acc_ref[0] += jnp.sum(prod_c, axis=-1, keepdims=True)   # (R, 1)
        acc_ref[1] += jnp.sum(p_c, axis=-1, keepdims=True)
        acc_ref[2] += jnp.sum(l_c, axis=-1, keepdims=True)
        off += w

    @pl.when(hi == pl.num_programs(1) - 1)
    def _finalize():
        s_tp = jnp.sum(acc_ref[0])
        s_p = jnp.sum(acc_ref[1])
        s_l = jnp.sum(acc_ref[2])
        rid = jax.lax.broadcasted_iota(jnp.int32, (_SUB, _LANE), 0)
        out_ref[0] = jnp.where(rid == 0, s_tp,
                     jnp.where(rid == 1, s_p,
                     jnp.where(rid == 2, s_l, 0.0)))


def _tversky_sums_dense(pred, label, block_budget):
    # Lane-dense 2-D view: rows = leading dims, lanes = flattened trailing
    # spatial (both merges are free, row-major).
    if pred.ndim >= 3:
        r = pred.shape[0] * pred.shape[1]
        s = int(math.prod(pred.shape[2:]))
    elif pred.ndim == 2:
        r, s = pred.shape
    else:
        r, s = 1, pred.shape[0]
    r = max(r, 1)
    s = max(s, 1)
    # TODO(synk): row-block extremely large leading dims (r >> 8192) instead
    # of taking the full row extent per block.
    pred2 = pred.reshape(r, s)
    lab2 = label.reshape(r, s)

    rp = _round_up(r, _SUB)
    per_lane = 2 * rp * 4 + 2 * rp * 4          # both operands, double-buffered
    ts = max(_LANE, _round_down(block_budget // per_lane, _LANE))
    if s <= ts:
        ts = s
        total_tiles = 1
    else:
        total_tiles = pl.cdiv(s, ts)

    nsplit = 2 if total_tiles >= 2 else 1       # keep both v7x TCs busy
    num_h = pl.cdiv(total_tiles, nsplit)
    needs_mask = (nsplit * num_h * ts) != s

    chunk = max(_LANE, _round_down(_CHUNK_TARGET_BYTES // (rp * 4), _LANE))

    if nsplit == 1:
        io_map = lambda gi, hi: (0, hi)
    else:
        io_map = lambda gi, hi: (
            0, jnp.minimum((gi % nsplit) * num_h + hi, total_tiles - 1))

    kernel = functools.partial(
        _tversky_dense_kernel, s_total=s, ts=ts, chunk=chunk, nsplit=nsplit,
        num_h=num_h, needs_mask=needs_mask)

    out = pl.pallas_call(
        kernel,
        out_shape=jax.ShapeDtypeStruct((nsplit, _SUB, _LANE), jnp.float32),
        grid_spec=pltpu.PrefetchScalarGridSpec(
            num_scalar_prefetch=0,
            grid=(nsplit, num_h),
            in_specs=[
                pl.BlockSpec((r, ts), io_map),
                pl.BlockSpec((r, ts), io_map),
            ],
            out_specs=pl.BlockSpec((1, _SUB, _LANE), lambda gi, hi: (gi, 0, 0)),
            scratch_shapes=[pltpu.VMEM((3, r, 1), jnp.float32)],
        ),
        compiler_params=pltpu.CompilerParams(
            dimension_semantics=("parallel", "arbitrary"),
            vmem_limit_bytes=_VMEM_LIMIT),
    )(pred2, lab2)
    return jnp.sum(out[:, 0, 0]), jnp.sum(out[:, 1, 0]), jnp.sum(out[:, 2, 0])


# ---------------------------------------------------------------------------
# Public wrapper (matches TverskyLoss.forward for batch_loss=False).
# ---------------------------------------------------------------------------
def tversky_loss(pred, label, alpha=1.0, beta=1.0, gamma=1.0,
                 batch_loss=False, block_budget_bytes=_BLOCK_BUDGET):
    if batch_loss:
        # TODO(synk): batch_loss=True path (per-(dim0, last-dim) partial sums
        # followed by mean of ratios) not implemented.
        raise NotImplementedError("batch_loss=True not implemented")

    if pred.ndim == label.ndim + 1:
        tp, sp, sl = _tversky_sums_onehot(pred, label, block_budget_bytes)
    else:
        tp, sp, sl = _tversky_sums_dense(pred, label, block_budget_bytes)

    fp = sp - tp            # == sum(pred * (1 - label))
    fn = sl - tp            # == sum((1 - pred) * label)
    # NaN when the denominator is 0 -- matches the PyTorch reference.
    ratio = tp / (tp + alpha * fp + beta * fn)
    return (1.0 - ratio) ** gamma


# ---------------------------------------------------------------------------
# Pure-JAX reference (mirrors the PyTorch module, batch_loss=False).
# ---------------------------------------------------------------------------
def _reference(pred, label, alpha=1.0, beta=1.0, gamma=1.0):
    if pred.ndim == label.ndim + 1:
        label = jax.nn.one_hot(label, pred.shape[1], dtype=pred.dtype, axis=1)
    label = label.astype(pred.dtype)
    tp = jnp.sum(pred * label)
    fp = jnp.sum(pred * (1.0 - label))
    fn = jnp.sum((1.0 - pred) * label)
    ratio = tp / (tp + alpha * fp + beta * fn)
    return (1.0 - ratio) ** gamma


if __name__ == "__main__":
    key = jax.random.PRNGKey(0)
    k1, k2, k3, k4, k5 = jax.random.split(key, 5)

    # 1) Main case: NCHW probabilities + integer class map.
    B, C, H, W = 2, 4, 16, 16
    logits = jax.random.normal(k1, (B, C, H, W), dtype=jnp.float32)
    pred = jax.nn.softmax(logits, axis=1)
    label = jax.random.randint(k2, (B, H, W), 0, C, jnp.int32)

    loss = jax.block_until_ready(tversky_loss(pred, label))
    ref = _reference(pred, label)
    assert jnp.allclose(loss, ref, atol=1e-5, rtol=1e-5), (loss, ref)

    # 2) Non-default hyper-parameters.
    loss2 = jax.block_until_ready(
        tversky_loss(pred, label, alpha=0.7, beta=0.3, gamma=2.0))
    ref2 = _reference(pred, label, alpha=0.7, beta=0.3, gamma=2.0)
    assert jnp.allclose(loss2, ref2, atol=1e-5, rtol=1e-5), (loss2, ref2)

    # 3) Multi-block accumulation + masked partial tail block (S=320, ts=128).
    B2, C2, H2, W2 = 2, 4, 20, 16
    logits2 = jax.random.normal(k3, (B2, C2, H2, W2), dtype=jnp.float32)
    pred2 = jax.nn.softmax(logits2, axis=1)
    label2 = jax.random.randint(k4, (B2, H2, W2), 0, C2, jnp.int32)
    loss3 = jax.block_until_ready(
        tversky_loss(pred2, label2, block_budget_bytes=4096))
    ref3 = _reference(pred2, label2)
    assert jnp.allclose(loss3, ref3, atol=1e-5, rtol=1e-5), (loss3, ref3)

    # 4) B==1 with multiple S tiles: exercises the 2-way parallel split with
    #    clamped duplicate tiles (v7x megacore path).
    logits3 = jax.random.normal(k5, (1, C2, H2, W2), dtype=jnp.float32)
    pred3 = jax.nn.softmax(logits3, axis=1)
    label3 = jax.random.randint(k2, (1, H2, W2), 0, C2, jnp.int32)
    loss4 = jax.block_until_ready(
        tversky_loss(pred3, label3, block_budget_bytes=4096))
    ref4 = _reference(pred3, label3)
    assert jnp.allclose(loss4, ref4, atol=1e-5, rtol=1e-5), (loss4, ref4)

    # 5) Dense-label path (label already expanded to pred's shape).
    soft = jax.nn.one_hot(label, C, dtype=jnp.float32, axis=1)
    loss5 = jax.block_until_ready(tversky_loss(pred, soft))
    ref5 = _reference(pred, soft)
    assert jnp.allclose(loss5, ref5, atol=1e-5, rtol=1e-5), (loss5, ref5)

    # 6) Dense-label path, multi-block + lane-masked tail + 2-way split.
    soft2 = jax.nn.one_hot(label2, C2, dtype=jnp.float32, axis=1)
    loss6 = jax.block_until_ready(
        tversky_loss(pred2, soft2, block_budget_bytes=4096))
    ref6 = _reference(pred2, soft2)
    assert jnp.allclose(loss6, ref6, atol=1e-5, rtol=1e-5), (loss6, ref6)

    print("KERNEL_OK")
</pallas_src>

<mosaic_0001>
module attributes {stable_mosaic.version = 11 : i64} {
  func.func @_tversky_onehot_kernel(%arg0: i32, %arg1: i32, %arg2: memref<1x4x256xf32, #tpu.memory_space<vmem>>, %arg3: memref<1x1x256xi32, #tpu.memory_space<vmem>>, %arg4: memref<1x8x128xf32, #tpu.memory_space<vmem>>, %arg5: memref<4x1xf32, #tpu.memory_space<vmem>>, %arg6: memref<4x1xf32, #tpu.memory_space<vmem>>, %arg7: memref<1x1xf32, #tpu.memory_space<vmem>>) attributes {dimension_semantics = [#tpu.dimension_semantics<parallel>, #tpu.dimension_semantics<arbitrary>], iteration_bounds = array<i64: 2, 1>, scalar_prefetch = 0 : i64, scratch_operands = 3 : i64, tpu.core_type = #tpu.core_type<tc>, window_params = [{transform_indices = @transform_0, window_bounds = array<i64: 1, 4, 256>}, {transform_indices = @transform_1, window_bounds = array<i64: 1, 1, 256>}, {transform_indices = @transform_2, window_bounds = array<i64: 1, 8, 128>}]} {
    %c0_i32 = arith.constant 0 : i32
    %0 = arith.cmpi eq, %arg1, %c0_i32 : i32
    %1 = arith.extui %0 : i1 to i32
    %c0_i32_0 = arith.constant 0 : i32
    %2 = arith.cmpi ne, %1, %c0_i32_0 : i32
    scf.if %2 {
      %cst_24 = arith.constant 0.000000e+00 : f32
      %37 = vector.broadcast %cst_24 : f32 to vector<4x1xf32>
      %c0_25 = arith.constant 0 : index
      %c0_26 = arith.constant 0 : index
      %38 = vector.load %arg5[%c0_25, %c0_26] : memref<4x1xf32, #tpu.memory_space<vmem>>, vector<4x1xf32>
      tpu.vector_store %arg5[%c0_25, %c0_26], %37 {strides = array<i32>} : memref<4x1xf32, #tpu.memory_space<vmem>>, vector<4x1xf32>,
      %cst_27 = arith.constant 0.000000e+00 : f32
      %39 = vector.broadcast %cst_27 : f32 to vector<4x1xf32>
      %c0_28 = arith.constant 0 : index
      %c0_29 = arith.constant 0 : index
      %40 = vector.load %arg6[%c0_28, %c0_29] : memref<4x1xf32, #tpu.memory_space<vmem>>, vector<4x1xf32>
      tpu.vector_store %arg6[%c0_28, %c0_29], %39 {strides = array<i32>} : memref<4x1xf32, #tpu.memory_space<vmem>>, vector<4x1xf32>,
      %cst_30 = arith.constant 0.000000e+00 : f32
      %41 = vector.broadcast %cst_30 : f32 to vector<1x1xf32>
      %c0_31 = arith.constant 0 : index
      %c0_32 = arith.constant 0 : index
      %42 = vector.load %arg7[%c0_31, %c0_32] : memref<1x1xf32, #tpu.memory_space<vmem>>, vector<1x1xf32>
      tpu.vector_store %arg7[%c0_31, %c0_32], %41 {strides = array<i32>} : memref<1x1xf32, #tpu.memory_space<vmem>>, vector<1x1xf32>,
    } else {
    }
    %c0 = arith.constant 0 : index
    %c0_1 = arith.constant 0 : index
    %c0_2 = arith.constant 0 : index
    %3 = vector.load %arg2[%c0, %c0_1, %c0_2] : memref<1x4x256xf32, #tpu.memory_space<vmem>>, vector<1x4x256xf32>
    %4 = vector.shape_cast %3 : vector<1x4x256xf32> to vector<4x256xf32>
    %c0_3 = arith.constant 0 : index
    %c0_4 = arith.constant 0 : index
    %c0_5 = arith.constant 0 : index
    %5 = vector.load %arg3[%c0_3, %c0_4, %c0_5] : memref<1x1x256xi32, #tpu.memory_space<vmem>>, vector<1x1x256xi32>
    %6 = vector.shape_cast %5 : vector<1x1x256xi32> to vector<1x256xi32>
    %7 = tpu.iota {dimensions = array<i32: 0>} : vector<4x256xi32>
    %8 = vector.broadcast %6 : vector<1x256xi32> to vector<4x256xi32>
    %9 = arith.cmpi eq, %8, %7 : vector<4x256xi32>
    %c0_i32_6 = arith.constant 0 : i32
    %10 = vector.broadcast %c0_i32_6 : i32 to vector<1x256xi32>
    %11 = arith.cmpi sge, %6, %10 : vector<1x256xi32>
    %c4_i32 = arith.constant 4 : i32
    %12 = vector.broadcast %c4_i32 : i32 to vector<1x256xi32>
    %13 = arith.cmpi slt, %6, %12 : vector<1x256xi32>
    %14 = arith.andi %11, %13 : vector<1x256xi1>
    %cst = arith.constant 0.000000e+00 : f32
    %15 = vector.broadcast %cst : f32 to vector<4x256xf32>
    %16 = arith.select %9, %4, %15 : vector<4x256xi1>, vector<4x256xf32>
    %c0_7 = arith.constant 0 : index
    %c0_8 = arith.constant 0 : index
    %17 = vector.load %arg5[%c0_7, %c0_8] : memref<4x1xf32, #tpu.memory_space<vmem>>, vector<4x1xf32>
    %cst_9 = arith.constant dense<0.000000e+00> : vector<4xf32>
    %18 = vector.multi_reduction <add>, %16, %cst_9 [1] : vector<4x256xf32> to vector<4xf32>
    %19 = vector.shape_cast %18 : vector<4xf32> to vector<4x1xf32>
    %20 = arith.addf %17, %19 : vector<4x1xf32>
    %c0_10 = arith.constant 0 : index
    %c0_11 = arith.constant 0 : index
    %21 = vector.load %arg5[%c0_10, %c0_11] : memref<4x1xf32, #tpu.memory_space<vmem>>, vector<4x1xf32>
    tpu.vector_store %arg5[%c0_10, %c0_11], %20 {strides = array<i32>} : memref<4x1xf32, #tpu.memory_space<vmem>>, vector<4x1xf32>,
    %c0_12 = arith.constant 0 : index
    %c0_13 = arith.constant 0 : index
    %22 = vector.load %arg6[%c0_12, %c0_13] : memref<4x1xf32, #tpu.memory_space<vmem>>, vector<4x1xf32>
    %cst_14 = arith.constant dense<0.000000e+00> : vector<4xf32>
    %23 = vector.multi_reduction <add>, %4, %cst_14 [1] : vector<4x256xf32> to vector<4xf32>
    %24 = vector.shape_cast %23 : vector<4xf32> to vector<4x1xf32>
    %25 = arith.addf %22, %24 : vector<4x1xf32>
    %c0_15 = arith.constant 0 : index
    %c0_16 = arith.constant 0 : index
    %26 = vector.load %arg6[%c0_15, %c0_16] : memref<4x1xf32, #tpu.memory_space<vmem>>, vector<4x1xf32>
    tpu.vector_store %arg6[%c0_15, %c0_16], %25 {strides = array<i32>} : memref<4x1xf32, #tpu.memory_space<vmem>>, vector<4x1xf32>,
    %c0_17 = arith.constant 0 : index
    %c0_18 = arith.constant 0 : index
    %27 = vector.load %arg7[%c0_17, %c0_18] : memref<1x1xf32, #tpu.memory_space<vmem>>, vector<1x1xf32>
    %28 = arith.extui %14 : vector<1x256xi1> to vector<1x256xi32>
    %29 = arith.sitofp %28 : vector<1x256xi32> to vector<1x256xf32>
    %cst_19 = arith.constant dense<0.000000e+00> : vector<1xf32>
    %30 = vector.multi_reduction <add>, %29, %cst_19 [1] : vector<1x256xf32> to vector<1xf32>
    %31 = vector.shape_cast %30 : vector<1xf32> to vector<1x1xf32>
    %32 = arith.addf %27, %31 : vector<1x1xf32>
    %c0_20 = arith.constant 0 : index
    %c0_21 = arith.constant 0 : index
    %33 = vector.load %arg7[%c0_20, %c0_21] : memref<1x1xf32, #tpu.memory_space<vmem>>, vector<1x1xf32>
    tpu.vector_store %arg7[%c0_20, %c0_21], %32 {strides = array<i32>} : memref<1x1xf32, #tpu.memory_space<vmem>>, vector<1x1xf32>,
    %c0_i32_22 = arith.constant 0 : i32
    %34 = arith.cmpi eq, %arg1, %c0_i32_22 : i32
    %35 = arith.extui %34 : i1 to i32
    %c0_i32_23 = arith.constant 0 : i32
    %36 = arith.cmpi ne, %35, %c0_i32_23 : i32
    scf.if %36 {
      %c0_24 = arith.constant 0 : index
      %c0_25 = arith.constant 0 : index
      %37 = vector.load %arg5[%c0_24, %c0_25] : memref<4x1xf32, #tpu.memory_space<vmem>>, vector<4x1xf32>
      %38 = vector.shape_cast %37 : vector<4x1xf32> to vector<1x4x1xf32>
      %cst_26 = arith.constant dense<0.000000e+00> : vector<1xf32>
      %39 = vector.multi_reduction <add>, %38, %cst_26 [1, 2] : vector<1x4x1xf32> to vector<1xf32>
      %40 = vector.shape_cast %39 : vector<1xf32> to vector<1x1x1xf32>
      %41 = vector.extract %40[0, 0, 0] : f32 from vector<1x1x1xf32>
      %c0_27 = arith.constant 0 : index
      %c0_28 = arith.constant 0 : index
      %42 = vector.load %arg6[%c0_27, %c0_28] : memref<4x1xf32, #tpu.memory_space<vmem>>, vector<4x1xf32>
      %43 = vector.shape_cast %42 : vector<4x1xf32> to vector<1x4x1xf32>
      %cst_29 = arith.constant dense<0.000000e+00> : vector<1xf32>
      %44 = vector.multi_reduction <add>, %43, %cst_29 [1, 2] : vector<1x4x1xf32> to vector<1xf32>
      %45 = vector.shape_cast %44 : vector<1xf32> to vector<1x1x1xf32>
      %46 = vector.extract %45[0, 0, 0] : f32 from vector<1x1x1xf32>
      %c0_30 = arith.constant 0 : index
      %c0_31 = arith.constant 0 : index
      %47 = vector.load %arg7[%c0_30, %c0_31] : memref<1x1xf32, #tpu.memory_space<vmem>>, vector<1x1xf32>
      %48 = vector.shape_cast %47 : vector<1x1xf32> to vector<1x1x1xf32>
      %cst_32 = arith.constant dense<0.000000e+00> : vector<1xf32>
      %49 = vector.multi_reduction <add>, %48, %cst_32 [1, 2] : vector<1x1x1xf32> to vector<1xf32>
      %50 = vector.shape_cast %49 : vector<1xf32> to vector<1x1x1xf32>
      %51 = vector.extract %50[0, 0, 0] : f32 from vector<1x1x1xf32>
      %52 = tpu.iota {dimensions = array<i32: 0>} : vector<8x128xi32>
      %c0_i32_33 = arith.constant 0 : i32
      %53 = vector.broadcast %c0_i32_33 : i32 to vector<8x128xi32>
      %54 = arith.cmpi eq, %52, %53 : vector<8x128xi32>
      %c1_i32 = arith.constant 1 : i32
      %55 = vector.broadcast %c1_i32 : i32 to vector<8x128xi32>
      %56 = arith.cmpi eq, %52, %55 : vector<8x128xi32>
      %c2_i32 = arith.constant 2 : i32
      %57 = vector.broadcast %c2_i32 : i32 to vector<8x128xi32>
      %58 = arith.cmpi eq, %52, %57 : vector<8x128xi32>
      %cst_34 = arith.constant 0.000000e+00 : f32
      %59 = vector.broadcast %51 : f32 to vector<8x128xf32>
      %60 = vector.broadcast %cst_34 : f32 to vector<8x128xf32>
      %61 = arith.select %58, %59, %60 : vector<8x128xi1>, vector<8x128xf32>
      %62 = vector.broadcast %46 : f32 to vector<8x128xf32>
      %63 = arith.select %56, %62, %61 : vector<8x128xi1>, vector<8x128xf32>
      %64 = vector.broadcast %41 : f32 to vector<8x128xf32>
      %65 = arith.select %54, %64, %63 : vector<8x128xi1>, vector<8x128xf32>
      %c0_35 = arith.constant 0 : index
      %c0_36 = arith.constant 0 : index
      %c0_37 = arith.constant 0 : index
      %66 = vector.load %arg4[%c0_35, %c0_36, %c0_37] : memref<1x8x128xf32, #tpu.memory_space<vmem>>, vector<1x8x128xf32>
      %67 = vector.shape_cast %66 : vector<1x8x128xf32> to vector<8x128xf32>
      %68 = vector.shape_cast %65 : vector<8x128xf32> to vector<1x8x128xf32>
      tpu.vector_store %arg4[%c0_35, %c0_36, %c0_37], %68 {strides = array<i32>} : memref<1x8x128xf32, #tpu.memory_space<vmem>>, vector<1x8x128xf32>,
    } else {
    }
    return
  }
  func.func @transform_0(%arg0: i32, %arg1: i32) -> (i32, i32, i32) {
    %c0_i32 = arith.constant 0 : i32
    %c0_i32_0 = arith.constant 0 : i32
    return %arg0, %c0_i32, %arg1 : i32, i32, i32
  }
  func.func @transform_1(%arg0: i32, %arg1: i32) -> (i32, i32, i32) {
    %c0_i32 = arith.constant 0 : i32
    %c0_i32_0 = arith.constant 0 : i32
    return %arg0, %c0_i32, %arg1 : i32, i32, i32
  }
  func.func @transform_2(%arg0: i32, %arg1: i32) -> (i32, i32, i32) {
    %c0_i32 = arith.constant 0 : i32
    %c0_i32_0 = arith.constant 0 : i32
    %c0_i32_1 = arith.constant 0 : i32
    return %arg0, %c0_i32, %c0_i32_0 : i32, i32, i32
  }
}

</mosaic_0001>

<llo_original>
// kernel: tpu_custom_call.1
$region0: #{tpu_custom_call.1}
  #allocation0 [shape = 'u32[]', space=smem, size = 0x4, offset = 0x4, fixed_abs, tag = 'smem constant byte address 0x4 - core index']
  #allocation1 [shape = 'u32[144,128]{1,0:T(1,128)}', space=vmem, size = 0x12000, scoped, tag = 'internal scratch']
  #allocation2 [shape = 'f32[4,1]{1,0:T(4,128)}', space=vmem, size = 0x800, scoped, tag = 'scratch operand']
  #allocation3 [shape = 'f32[4,1]{1,0:T(4,128)}', space=vmem, size = 0x800, scoped, tag = 'scratch operand']
  #allocation4 [shape = 'f32[1,1]{1,0:T(1,128)}', space=vmem, size = 0x200, scoped, tag = 'scratch operand']
  %s0 = inlined_call_operand.hbm [shape: f32[2,4,256], index: 0, kind: input, shape index: {}]
  %s1 = inlined_call_operand.hbm [shape: s32[2,1,256], index: 1, kind: input, shape index: {}]
  %s2 = inlined_call_operand.hbm [shape: f32[2,8,128], index: 2, kind: output, shape index: {}]
  %s3 = sld [smem:[#allocation0]]
  $region57: #{tpu_custom_call.1} parent=0
    _
  %s5 = ssub.s32 1, %s3
  %s6 = scalar_select 0, %s5, %s3
  $region1: #{tpu_custom_call.1} parent=0
    #allocation5 [shape = 'u8[8192]{0}', space=vmem, size = 0x2000, scoped, tag = 'input window, operand 0']
    #allocation6 [shape = 's32[2]{0}', space=sflag, size = 0x8, scoped, tag = 'scoped memory for tpu_custom_call.1']
    #allocation7 [shape = 's32[2]{0}', space=sflag, size = 0x8, scoped, tag = 'scoped memory for tpu_custom_call.1']
    #allocation8 [shape = 'u8[2048]{0}', space=vmem, size = 0x800, scoped, tag = 'input window, operand 1']
    #allocation9 [shape = 's32[2]{0}', space=sflag, size = 0x8, scoped, tag = 'scoped memory for tpu_custom_call.1']
    #allocation10 [shape = 'u8[8192]{0}', space=vmem, size = 0x2000, scoped, tag = 'output window, operand 0']
    %7 = vsyncpa [#allocation6], 0
    %s8 = scalar_lea.sflag [#allocation6], 1
    %9 = vsyncpa %s8, 0
    %10 = vsyncpa [#allocation9], 0
    %s11 = scalar_lea.sflag [#allocation9], 1
    %12 = vsyncpa %s11, 0
    %13 = vsyncpa [#allocation7], 0
    %s14 = scalar_lea.sflag [#allocation7], 1
    %15 = vsyncpa %s14, 0
    loop: start=0, step=1, limit=4
    $region2: #{tpu_custom_call.1} parent=1 // loop_pre_header
      _
    $region3: #{tpu_custom_call.1} parent=1 // loop_header
      %s17 = sphi 0, %s21
      %p18 = scmp.ge.s32.totalorder %s17, 4
      %s24 = sphi 0, %s36
      %s25 = sphi 0, %s32
      %s26 = sphi 0, %s24
      %s27 = sphi 0, %s25
      %s28 = sphi 0, %s26
      %s29 = sphi 0, %s27
      %s41 = sphi 0, %s43
      %s44 = sphi 0, %s41
      %s45 = sphi 0, %s44
      %s61 = sphi 0, %s45
      %s69 = sphi 0, %s71
      %s72 = sphi 0, %s69
      %s73 = sphi 0, %s72
      %s89 = sphi 0, %s73
      %s95 = sphi 0, %s97
      %s98 = sphi 0, %s95
      %s99 = sphi 0, %s98
      %s115 = sphi 0, %s99
    $region4: #{tpu_custom_call.1} parent=1 // loop_header_branch
      %20 = sbr.rel (%p18) target = $region8
    $region5: #{tpu_custom_call.1} parent=1 // loop_body
      %s22 = ssub.s32 %s17, 1
      %s23 = ssub.s32 %s17, 2
      %s30 = sadd.s32 1, %s25
      %p31 = scmp.ge.s32.totalorder %s30, 1
      %s32 = scalar_select %p31, 0, %s30
      %s33 = sadd.s32 1, %s24
      %s34 = scalar_select %p31, %s33, %s24
      %p35 = scmp.ge.s32.totalorder %s34, 2
      %s36 = scalar_select %p35, 0, %s34
      %s37 = ssub.s32 %s24, %s36
      %s38 = ssub.s32 %s25, %s32
      %s39 = sor.u32 %s37, %s38
      %p40 = scmp.eq.s32.totalorder %s39, 0
      %s42 = sadd.s32 %s41, 1
      %s43 = scalar_select %p40, %s41, %s42
      %p46 = pneg %p40
      %p47 = scmp.eq.s32.totalorder %s17, 1
      %p48 = por %p46, %p47
      %p49 = scmp.ne.s32.totalorder %s41, %s44
      %p50 = scmp.eq.s32.totalorder %s17, 0
      %p51 = por %p49, %p50
      %p52 = scmp.ne.s32.totalorder %s41, %s44
      %p53 = scmp.eq.s32.totalorder %s22, 1
      %p54 = por %p52, %p53
      %p55 = scmp.ne.s32.totalorder %s44, %s45
      %p56 = scmp.eq.s32.totalorder %s22, 0
      %p57 = por %p55, %p56
      %p58 = scmp.ne.s32.totalorder %s44, %s45
      %p59 = scmp.eq.s32.totalorder %s23, 1
      %p60 = por %p58, %p59
      %p62 = scmp.ne.s32.totalorder %s45, %s61
      %p63 = scmp.eq.s32.totalorder %s23, 0
      %p64 = por %p62, %p63
      %s65 = ssub.s32 %s24, %s36
      %s66 = ssub.s32 %s25, %s32
      %s67 = sor.u32 %s65, %s66
      %p68 = scmp.eq.s32.totalorder %s67, 0
      %s70 = sadd.s32 %s69, 1
      %s71 = scalar_select %p68, %s69, %s70
      %p74 = pneg %p68
      %p75 = scmp.eq.s32.totalorder %s17, 1
      %p76 = por %p74, %p75
      %p77 = scmp.ne.s32.totalorder %s69, %s72
      %p78 = scmp.eq.s32.totalorder %s17, 0
      %p79 = por %p77, %p78
      %p80 = scmp.ne.s32.totalorder %s69, %s72
      %p81 = scmp.eq.s32.totalorder %s22, 1
      %p82 = por %p80, %p81
      %p83 = scmp.ne.s32.totalorder %s72, %s73
      %p84 = scmp.eq.s32.totalorder %s22, 0
      %p85 = por %p83, %p84
      %p86 = scmp.ne.s32.totalorder %s72, %s73
      %p87 = scmp.eq.s32.totalorder %s23, 1
      %p88 = por %p86, %p87
      %p90 = scmp.ne.s32.totalorder %s73, %s89
      %p91 = scmp.eq.s32.totalorder %s23, 0
      %p92 = por %p90, %p91
      %s93 = ssub.s32 %s24, %s36
      %p94 = scmp.eq.s32.totalorder %s93, 0
      %s96 = sadd.s32 %s95, 1
      %s97 = scalar_select %p94, %s95, %s96
      %p100 = pneg %p94
      %p101 = scmp.eq.s32.totalorder %s17, 1
      %p102 = por %p100, %p101
      %p103 = scmp.ne.s32.totalorder %s95, %s98
      %p104 = scmp.eq.s32.totalorder %s17, 0
      %p105 = por %p103, %p104
      %p106 = scmp.ne.s32.totalorder %s95, %s98
      %p107 = scmp.eq.s32.totalorder %s22, 1
      %p108 = por %p106, %p107
      %p109 = scmp.ne.s32.totalorder %s98, %s99
      %p110 = scmp.eq.s32.totalorder %s22, 0
      %p111 = por %p109, %p110
      %p112 = scmp.ne.s32.totalorder %s98, %s99
      %p113 = scmp.eq.s32.totalorder %s23, 1
      %p114 = por %p112, %p113
      %p116 = scmp.ne.s32.totalorder %s99, %s115
      %p117 = scmp.eq.s32.totalorder %s23, 0
      %p118 = por %p116, %p117
      %p119 = scmp.le.s32.totalorder 1, %s17
      %p120 = scmp.lt.s32.totalorder %s17, 3
      %p121 = pnand %p119, %p120
      %p122 = pneg %p121
      // Predicated region
      $region9: #{tpu_custom_call.1} parent=5 // pred_check
        _
      $region10: #{tpu_custom_call.1} parent=5 // pred_check_branch
        %124 = sbr.rel (%p121) target = $region12
      $region11: #{tpu_custom_call.1} parent=5 // pred_region
        %s125 = ssub.s32 %s17, 1
      $region12: #{tpu_custom_call.1} parent=5 // pred_fallthru
        _
      %p126 = scmp.lt.s32.totalorder %s17, 2
      // Predicated region
      $region13: #{tpu_custom_call.1} parent=5 // pred_check
        %p127 = pneg %p126
      $region14: #{tpu_custom_call.1} parent=5 // pred_check_branch
        %129 = sbr.rel (%p127) target = $region16
      $region15: #{tpu_custom_call.1} parent=5 // pred_region
        // Predicated region
        $region17: #{tpu_custom_call.1} parent=15 // pred_check
          %p130 = pneg %p51
        $region18: #{tpu_custom_call.1} parent=15 // pred_check_branch
          %132 = sbr.rel (%p130) target = $region20
        $region19: #{tpu_custom_call.1} parent=15 // pred_region
          %s133 = sand.u32 %s41, 1
          %s134 = scalar_lea.sflag [#allocation6], %s133
          %s135 = sand.u32 %s41, 1
          %s136 = smul.addr %s135, 8
          %s137 = scalar_lea.vmem [#allocation5], %s136
          %s138 = smul.u32 2, %s25
          %s140 = ssub.s32 128, 128
          %141 = vsyncadd %s134, %s140
          %s142 = smul.addr %s24, 2
          %s143 = sadd.s32 %s138, %s142
          %s144 = smul.addr %s143, 64
          %s145 = scalar_lea.hbm %s0, %s144
          %s147 = sshll.u32 %s137, 4
          %s148 = int_to_ptr.vmem [resolvable:$true] %s147
          %150 = dma.hbm_to_vmem [thread:$0]  %s145, 128, %s148, %s134
        $region20: #{tpu_custom_call.1} parent=15 // pred_fallthru
          _
        // Predicated region
        $region21: #{tpu_custom_call.1} parent=15 // pred_check
          %p151 = pneg %p79
        $region22: #{tpu_custom_call.1} parent=15 // pred_check_branch
          %153 = sbr.rel (%p151) target = $region24
        $region23: #{tpu_custom_call.1} parent=15 // pred_region
          %s154 = sand.u32 %s69, 1
          %s155 = scalar_lea.sflag [#allocation9], %s154
          %s156 = sand.u32 %s69, 1
          %s157 = smul.addr %s156, 2
          %s158 = scalar_lea.vmem [#allocation8], %s157
          %s159 = smul.u32 2, %s25
          %s161 = ssub.s32 32, 32
          %162 = vsyncadd %s155, %s161
          %s163 = smul.addr %s24, 2
          %s164 = sadd.s32 %s159, %s163
          %s165 = smul.addr %s164, 16
          %s166 = scalar_lea.hbm %s1, %s165
          %s168 = sshll.u32 %s158, 4
          %s169 = int_to_ptr.vmem [resolvable:$true] %s168
          %171 = dma.hbm_to_vmem [thread:$0]  %s166, 32, %s169, %s155
        $region24: #{tpu_custom_call.1} parent=15 // pred_fallthru
          _
      $region16: #{tpu_custom_call.1} parent=5 // pred_fallthru
        _
      %p172 = scmp.le.s32.totalorder 1, %s17
      %p173 = scmp.lt.s32.totalorder %s17, 3
      %p174 = pnand %p172, %p173
      %p175 = pneg %p174
      // Predicated region
      $region25: #{tpu_custom_call.1} parent=5 // pred_check
        _
      $region26: #{tpu_custom_call.1} parent=5 // pred_check_branch
        %177 = sbr.rel (%p174) target = $region28
      $region27: #{tpu_custom_call.1} parent=5 // pred_region
        %s178 = ssub.s32 %s17, 1
        %s179 = sand.u32 %s44, 1
        %s180 = scalar_lea.sflag [#allocation6], %s179
        %s181 = sand.u32 %s44, 1
        %s182 = smul.addr %s181, 8
        %s183 = scalar_lea.vmem [#allocation5], %s182
        // Predicated region
        $region29: #{tpu_custom_call.1} parent=27 // pred_check
          %p184 = pneg %p57
        $region30: #{tpu_custom_call.1} parent=27 // pred_check_branch
          %186 = sbr.rel (%p184) target = $region32
        $region31: #{tpu_custom_call.1} parent=27 // pred_region
          %187 = dma.done %s180, 128
        $region32: #{tpu_custom_call.1} parent=27 // pred_fallthru
          _
        %s188 = sand.u32 %s72, 1
        %s189 = scalar_lea.sflag [#allocation9], %s188
        %s190 = sand.u32 %s72, 1
        %s191 = smul.addr %s190, 2
        %s192 = scalar_lea.vmem [#allocation8], %s191
        // Predicated region
        $region33: #{tpu_custom_call.1} parent=27 // pred_check
          %p193 = pneg %p85
        $region34: #{tpu_custom_call.1} parent=27 // pred_check_branch
          %195 = sbr.rel (%p193) target = $region36
        $region35: #{tpu_custom_call.1} parent=27 // pred_region
          %196 = dma.done %s189, 32
        $region36: #{tpu_custom_call.1} parent=27 // pred_fallthru
          _
        %s197 = sand.u32 %s44, 1
        %s198 = scalar_lea.sflag [#allocation6], %s197
        %s199 = sand.u32 %s44, 1
        %s200 = smul.addr %s199, 8
        %s201 = scalar_lea.vmem [#allocation5], %s200
        %p202 = pneg %p57
        %p203 = pneg %p54
        %s204 = sand.u32 %s72, 1
        %s205 = scalar_lea.sflag [#allocation9], %s204
        %s206 = sand.u32 %s72, 1
        %s207 = smul.addr %s206, 2
        %s208 = scalar_lea.vmem [#allocation8], %s207
        %p209 = pneg %p85
        %p210 = pneg %p82
        %p211 = pneg %p111
        %p212 = pneg %p108
        %s213 = sand.u32 %s98, 1
        %s214 = scalar_lea.sflag [#allocation7], %s213
        %s215 = sand.u32 %s98, 1
        %s216 = smul.addr %s215, 8
        %s217 = scalar_lea.vmem [#allocation10], %s216
        %s218 = smul.u32 2, %s27
        %s219 = smul.u32 2, %s27
        %p220 = scmp.eq.s32.totalorder %s27, 0
        // Predicated region
        $region37: #{tpu_custom_call.1} parent=27 // pred_check
          %p221 = pneg %p220
        $region38: #{tpu_custom_call.1} parent=27 // pred_check_branch
          %223 = sbr.rel (%p221) target = $region40
        $region39: #{tpu_custom_call.1} parent=27 // pred_region
          %vm224 = vcmask 3072
          %225 = vst.msk [vmem:[#allocation2] sm:$0xf] %vm224, 0.0
          %226 = vst.msk [vmem:[#allocation3] sm:$0xf] %vm224, 0.0
          %vm227 = vcmask 0
          %228 = vst.msk [vmem:[#allocation4] sm:$0x1] %vm227, 0.0
        $region40: #{tpu_custom_call.1} parent=27 // pred_fallthru
          _
        %v229 = vld [vmem:[%s183] sm:$0xff]
        %v230 = vld [vmem:[%s192] sm:$0x3]
        %v231 = vlaneseq
        %v232 = vshrl.u32 %v231, 7
        %v233 = vlaneseq
        %v234 = vshrl.u32 %v233, 7
        %v235 = vsub.s32 0, %v234
        %v236 = vrot.slane %v230, %v235
        %v237 = vlaneseq
        %v238 = vshrl.u32 %v237, 7
        %v239 = vsub.s32 1, %v238
        %v240 = vrot.slane %v230, %v239
        %vm241 = vcmp.eq.s32.totalorder %v236, %v232
        %vm242 = vcmp.eq.s32.totalorder %v240, %v232
        %vm243 = vcmp.ge.s32.totalorder %v230, 0
        %vm244 = vcmp.lt.s32.totalorder %v230, 4
        %vm245 = vmand %vm243, %vm244
        %v247 = vcombine.high %v229, %v229
        %v249 = vsel %vm241, %v229, 0.0
        %v250 = vsel %vm242, %v247, 0.0
        %v251 = vld [vmem:[#allocation2] sm:$0xf]
        %vm252 = vcmask 1043456
        %v253 = vsel %vm252, %v249, 0.0
        %v254 = vsel %vm252, %v250, 0.0
        %v255 = vadd.f32 %v253, %v254
        %256 = vadd.xlane.f32.xlu0 %v255
        %v257 = vpop.xlane.xlu0 %256
        %v258 = vadd.f32 %v251, %v257
        %vm259 = vcmask 3072
        %260 = vst.msk [vmem:[#allocation2] sm:$0xf] %vm259, %v258
        %v261 = vld [vmem:[#allocation3] sm:$0xf]
        %v262 = vsel %vm252, %v229, 0.0
        %v263 = vsel %vm252, %v247, 0.0
        %v264 = vadd.f32 %v262, %v263
        %265 = vadd.xlane.f32.xlu0 %v264
        %v266 = vpop.xlane.xlu0 %265
        %v267 = vadd.f32 %v261, %v266
        %268 = vst.msk [vmem:[#allocation3] sm:$0xf] %vm259, %v267
        %v269 = vld [vmem:[#allocation4] sm:$0x1]
        %v270 = vsel %vm245, 1, 0
        %v271 = vcvt.s32.f32 %v270
        %v273 = vlaneseq
        %v274 = vshrl.u32 %v273, 7
        %v275 = vsub.s32 0, %v274
        %v276 = vrot.slane %v271, %v275
        %v277 = vlaneseq
        %v278 = vshrl.u32 %v277, 7
        %v279 = vsub.s32 1, %v278
        %v280 = vrot.slane %v271, %v279
        %vm283 = vcmask 1040384
        %v284 = vsel %vm283, %v276, 0.0
        %v285 = vsel %vm283, %v280, 0.0
        %v286 = vadd.f32 %v284, %v285
        %287 = vadd.xlane.f32.xlu0 %v286
        %v288 = vpop.xlane.xlu0 %287
        %v289 = vadd.f32 %v269, %v288
        %vm290 = vcmask 0
        %291 = vst.msk [vmem:[#allocation4] sm:$0x1] %vm290, %v289
        // Predicated region
        $region41: #{tpu_custom_call.1} parent=27 // pred_check
          %p292 = pneg %p220
        $region42: #{tpu_custom_call.1} parent=27 // pred_check_branch
          %294 = sbr.rel (%p292) target = $region44
        $region43: #{tpu_custom_call.1} parent=27 // pred_region
          %v295 = vld [vmem:[#allocation2] sm:$0xf]
          %v296 = vsel %vm259, %v295, 0.0
          %297 = vadd.xlane.f32.xlu0 %v296
          %v298 = vpop.xlane.xlu0 %297
          %v299 = vrot.slane %v298, 4
          %v300 = vadd.f32 %v298, %v299
          %v301 = vrot.slane %v300, 2
          %v302 = vadd.f32 %v300, %v301
          %v303 = vrot.slane %v302, 1
          %v304 = vadd.f32 %v302, %v303
          %s305 = vtos %v304
          %v306 = vld [vmem:[#allocation3] sm:$0xf]
          %v307 = vsel %vm259, %v306, 0.0
          %308 = vadd.xlane.f32.xlu0 %v307
          %v309 = vpop.xlane.xlu0 %308
          %v310 = vrot.slane %v309, 4
          %v311 = vadd.f32 %v309, %v310
          %v312 = vrot.slane %v311, 2
          %v313 = vadd.f32 %v311, %v312
          %v314 = vrot.slane %v313, 1
          %v315 = vadd.f32 %v313, %v314
          %s316 = vtos %v315
          %v317 = vld [vmem:[#allocation4] sm:$0x1]
          %v318 = vadd.f32 %v317, 0.0
          %s319 = vtos %v318
          %vm320 = vcmp.eq.s32.totalorder %v232, 0
          %vm321 = vcmp.eq.s32.totalorder %v232, 1
          %vm322 = vcmp.eq.s32.totalorder %v232, 2
          %v323 = vstv %s319
          %v324 = vsel %vm322, %v323, 0.0
          %v325 = vstv %s316
          %v326 = vsel %vm321, %v325, %v324
          %v327 = vstv %s305
          %v328 = vsel %vm320, %v327, %v326
          %329 = vst [vmem:[%s217] sm:$0xff] %v328
        $region44: #{tpu_custom_call.1} parent=27 // pred_fallthru
          _
        %s330 = sand.u32 %s98, 1
        %s331 = scalar_lea.sflag [#allocation7], %s330
        %s332 = sand.u32 %s98, 1
        %s333 = smul.addr %s332, 8
        %s334 = scalar_lea.vmem [#allocation10], %s333
        // Predicated region
        $region45: #{tpu_custom_call.1} parent=27 // pred_check
          %p335 = pneg %p108
        $region46: #{tpu_custom_call.1} parent=27 // pred_check_branch
          %337 = sbr.rel (%p335) target = $region48
        $region47: #{tpu_custom_call.1} parent=27 // pred_region
          %s339 = ssub.s32 128, 128
          %340 = vsyncadd %s331, %s339
          %s341 = smul.addr %s26, 128
          %s342 = scalar_lea.hbm %s2, %s341
          %s344 = sshll.u32 %s334, 4
          %s345 = int_to_ptr.vmem [resolvable:$true] %s344
          %347 = dma.vmem_to_hbm [thread:$0]  %s345, 128, %s342, %s331
        $region48: #{tpu_custom_call.1} parent=27 // pred_fallthru
          _
      $region28: #{tpu_custom_call.1} parent=5 // pred_fallthru
        _
      %p348 = scmp.le.s32.totalorder 2, %s17
      // Predicated region
      $region49: #{tpu_custom_call.1} parent=5 // pred_check
        %p349 = pneg %p348
      $region50: #{tpu_custom_call.1} parent=5 // pred_check_branch
        %351 = sbr.rel (%p349) target = $region52
      $region51: #{tpu_custom_call.1} parent=5 // pred_region
        %s352 = ssub.s32 %s17, 2
        // Predicated region
        $region53: #{tpu_custom_call.1} parent=51 // pred_check
          %p353 = pneg %p114
        $region54: #{tpu_custom_call.1} parent=51 // pred_check_branch
          %355 = sbr.rel (%p353) target = $region56
        $region55: #{tpu_custom_call.1} parent=51 // pred_region
          %s356 = sand.u32 %s99, 1
          %s357 = scalar_lea.sflag [#allocation7], %s356
          %s358 = sand.u32 %s99, 1
          %s359 = smul.addr %s358, 8
          %s360 = scalar_lea.vmem [#allocation10], %s359
          %361 = dma.done %s357, 128
        $region56: #{tpu_custom_call.1} parent=51 // pred_fallthru
          _
      $region52: #{tpu_custom_call.1} parent=5 // pred_fallthru
        _
    $region6: #{tpu_custom_call.1} parent=1 // loop_footer
      %s21 = sadd.s32 1, %s17
    $region7: #{tpu_custom_call.1} parent=1 // loop_footer_branch
      %16 = sbr.rel target = $region3
    $region8: #{tpu_custom_call.1} parent=1 // loop_exit
      _
    %362 = vsyncpa [#allocation6], 1
    %s363 = scalar_lea.sflag [#allocation6], 1
    %364 = vsyncpa %s363, 1
    %365 = vsyncpa [#allocation9], 1
    %s366 = scalar_lea.sflag [#allocation9], 1
    %367 = vsyncpa %s366, 1
    %368 = vsyncpa [#allocation7], 1
    %s369 = scalar_lea.sflag [#allocation7], 1
    %370 = vsyncpa %s369, 1

</llo_original>
